<compile_context>
chip_gen: v5e
topology: v5e:2x2
jax: 0.10.0
libtpu: 0.0.40
codegen_flags: <defaults>
</compile_context>

<pallas_src>
import jax
import jax.numpy as jnp
from jax import lax
from jax.experimental import pallas as pl
from jax.experimental.pallas import tpu as pltpu

LN_EPS = 1e-5


def _round_up(x, m):
    return ((x + m - 1) // m) * m


def pooler_end_logits_kernel(hs_ref, sp_ref, w0a_ref, w0b_ref, b0_ref,
                             g_ref, beta_ref, w1_ref, b1_ref, o_ref):
    # dense_0 on the split weight (equivalent to cat([hs, sp]) @ W0 + b0).
    # Operands stay in their stored dtype (bf16 -> full MXU rate); accumulate f32.
    h = jnp.dot(hs_ref[...], w0a_ref[...], preferred_element_type=jnp.float32)
    h = h + jnp.dot(sp_ref[...], w0b_ref[...], preferred_element_type=jnp.float32)
    h = h + b0_ref[...].astype(jnp.float32)

    # tanh activation (EUP slot, overlaps with MXU work)
    h = jnp.tanh(h)

    # Fused one-pass LayerNorm: var = E[h^2] - E[h]^2 (single reduction pass).
    mean = jnp.mean(h, axis=-1, keepdims=True)
    mean_sq = jnp.mean(h * h, axis=-1, keepdims=True)
    var = mean_sq - mean * mean
    hn = (h - mean) * lax.rsqrt(var + LN_EPS)
    hn = hn * g_ref[...].astype(jnp.float32) + beta_ref[...].astype(jnp.float32)

    # dense_1: (H -> C_padded) on the MXU; cast back to weight dtype so bf16
    # weights get bf16 LHS.
    out = jnp.dot(hn.astype(w1_ref.dtype), w1_ref[...],
                  preferred_element_type=jnp.float32)
    out = out + b1_ref[...].astype(jnp.float32)
    o_ref[...] = out.astype(o_ref.dtype)


def pooler_end_logits(hidden_states, start_positions, params, *, tm=512):
    """hidden_states: [B,S,Dh], start_positions: [B,S,Ds] with Dh+Ds == H.

    Returns [B, S, C] logits.
    """
    w0, b0, gamma, beta, w1, b1 = params
    B, S, Dh = hidden_states.shape
    Ds = start_positions.shape[-1]
    H = w0.shape[0]
    assert Dh + Ds == H, "cat([hidden, start], -1) must equal hidden_size"
    C = w1.shape[1]

    M = B * S
    hs2d = hidden_states.reshape(M, Dh)
    sp2d = start_positions.reshape(M, Ds)

    # Split W0: cat([hs, sp]) @ W0 == hs @ W0[:Dh] + sp @ W0[Dh:]
    w0a = w0[:Dh, :]
    w0b = w0[Dh:, :]

    # Lane-dense output: pad the logit dim up to a multiple of 128, slice later.
    Cp = _round_up(C, 128)
    if Cp != C:
        w1p = jnp.pad(w1, ((0, 0), (0, Cp - C)))
        b1p = jnp.pad(b1, ((0, Cp - C),))
    else:
        w1p, b1p = w1, b1

    # Row tile: large & MXU aligned for real workloads, shrunk for toy inputs.
    tm_eff = min(tm, _round_up(M, 8))
    M_pad = _round_up(M, tm_eff)
    if M_pad != M:
        hs2d = jnp.pad(hs2d, ((0, M_pad - M), (0, 0)))
        sp2d = jnp.pad(sp2d, ((0, M_pad - M), (0, 0)))

    # biases / LN params as (1, F) so they broadcast over the row tile
    b0_2d = b0.reshape(1, H)
    g_2d = gamma.reshape(1, H)
    beta_2d = beta.reshape(1, H)
    b1_2d = b1p.reshape(1, Cp)

    elt_a = jnp.dtype(hidden_states.dtype).itemsize
    elt_w = jnp.dtype(w0.dtype).itemsize
    elt_o = jnp.dtype(hidden_states.dtype).itemsize

    # Advisory cost estimate for XLA scheduling around the custom call.
    flops = int(M_pad * (2 * Dh * H + 2 * Ds * H + 2 * H * Cp + 6 * H))
    bytes_accessed = int(M_pad * (Dh + Ds) * elt_a + M_pad * Cp * elt_o
                         + (H * H + H * Cp + 4 * H + Cp) * elt_w)
    cost = pl.CostEstimate(flops=flops,
                           transcendentals=int(M_pad * H),
                           bytes_accessed=bytes_accessed)

    # VMEM budget: double-buffered activation/output tiles + resident weights
    # + f32 intermediates headroom. Capped so it is valid on v7x (64 MiB).
    est = (2 * tm_eff * (Dh + Ds) * elt_a
           + 2 * tm_eff * Cp * elt_o
           + 2 * (H * H + H * Cp + 4 * H + Cp) * elt_w
           + 4 * tm_eff * H * 4)
    vmem_limit = int(min(max(2 * est, 32 * 1024 * 1024), 64 * 1024 * 1024))

    grid = (M_pad // tm_eff,)
    out2d = pl.pallas_call(
        pooler_end_logits_kernel,
        out_shape=jax.ShapeDtypeStruct((M_pad, Cp), hidden_states.dtype),
        grid_spec=pltpu.PrefetchScalarGridSpec(
            num_scalar_prefetch=0,
            grid=grid,
            in_specs=[
                pl.BlockSpec((tm_eff, Dh), lambda i: (i, 0)),  # hidden rows
                pl.BlockSpec((tm_eff, Ds), lambda i: (i, 0)),  # start rows
                pl.BlockSpec((Dh, H), lambda i: (0, 0)),       # W0 top half
                pl.BlockSpec((Ds, H), lambda i: (0, 0)),       # W0 bottom half
                pl.BlockSpec((1, H), lambda i: (0, 0)),        # b0
                pl.BlockSpec((1, H), lambda i: (0, 0)),        # gamma
                pl.BlockSpec((1, H), lambda i: (0, 0)),        # beta
                pl.BlockSpec((H, Cp), lambda i: (0, 0)),       # W1 (lane-padded)
                pl.BlockSpec((1, Cp), lambda i: (0, 0)),       # b1 (lane-padded)
            ],
            out_specs=pl.BlockSpec((tm_eff, Cp), lambda i: (i, 0)),
        ),
        compiler_params=pltpu.CompilerParams(
            dimension_semantics=("parallel",),
            vmem_limit_bytes=vmem_limit),
        cost_estimate=cost,
    )(hs2d, sp2d, w0a, w0b, b0_2d, g_2d, beta_2d, w1p, b1_2d)

    return out2d[:M, :C].reshape(B, S, C)


def init_params(key, hidden_size, num_classes, dtype=jnp.float32):
    """Deterministic synthetic parameters (shapes match the nn.Module __init__)."""
    k0, k1, k2, k3 = jax.random.split(key, 4)
    # stored as (in, out) so the kernel computes x @ W
    w0 = (jax.random.normal(k0, (hidden_size, hidden_size), dtype)
          * (1.0 / jnp.sqrt(jnp.asarray(hidden_size, dtype))))
    b0 = jax.random.normal(k1, (hidden_size,), dtype) * 0.02
    gamma = jnp.ones((hidden_size,), dtype)
    beta = jnp.zeros((hidden_size,), dtype)
    w1 = (jax.random.normal(k2, (hidden_size, num_classes), dtype)
          * (1.0 / jnp.sqrt(jnp.asarray(hidden_size, dtype))))
    b1 = jax.random.normal(k3, (num_classes,), dtype) * 0.02
    return (w0, b0, gamma, beta, w1, b1)


def reference(hidden_states, start_positions, params):
    w0, b0, gamma, beta, w1, b1 = params
    x = jnp.concatenate([hidden_states, start_positions], axis=-1)
    h = jnp.tanh(x @ w0 + b0)
    mean = jnp.mean(h, axis=-1, keepdims=True)
    var = jnp.mean((h - mean) ** 2, axis=-1, keepdims=True)
    hn = (h - mean) * lax.rsqrt(var + LN_EPS) * gamma + beta
    return hn @ w1 + b1


if __name__ == "__main__":
    B, S = 2, 8
    hidden_size = 32           # dense_0 input/output width
    num_classes = 8
    half = hidden_size // 2    # cat([hidden, start], -1) must equal hidden_size

    key = jax.random.PRNGKey(0)
    kp, kh, ks = jax.random.split(key, 3)

    params = init_params(kp, hidden_size, num_classes)
    hidden_states = jax.random.normal(kh, (B, S, half), jnp.float32)
    start_positions = jax.random.normal(ks, (B, S, half), jnp.float32)

    out = pooler_end_logits(hidden_states, start_positions, params)
    out = jax.block_until_ready(out)

    ref = reference(hidden_states, start_positions, params)
    assert out.shape == (B, S, num_classes)
    assert jnp.allclose(out, ref, atol=1e-4, rtol=1e-4)

    print("KERNEL_OK")
</pallas_src>

<mosaic_0001>
module attributes {stable_mosaic.version = 11 : i64} {
  func.func @pooler_end_logits_kernel(%arg0: i32, %arg1: memref<16x16xf32, #tpu.memory_space<vmem>>, %arg2: memref<16x16xf32, #tpu.memory_space<vmem>>, %arg3: memref<16x32xf32, #tpu.memory_space<vmem>>, %arg4: memref<16x32xf32, #tpu.memory_space<vmem>>, %arg5: memref<1x32xf32, #tpu.memory_space<vmem>>, %arg6: memref<1x32xf32, #tpu.memory_space<vmem>>, %arg7: memref<1x32xf32, #tpu.memory_space<vmem>>, %arg8: memref<32x128xf32, #tpu.memory_space<vmem>>, %arg9: memref<1x128xf32, #tpu.memory_space<vmem>>, %arg10: memref<16x128xf32, #tpu.memory_space<vmem>>) attributes {dimension_semantics = [#tpu.dimension_semantics<parallel>], iteration_bounds = array<i64: 1>, scalar_prefetch = 0 : i64, scratch_operands = 0 : i64, tpu.core_type = #tpu.core_type<tc>, window_params = [{transform_indices = @transform_0, window_bounds = array<i64: 16, 16>}, {transform_indices = @transform_1, window_bounds = array<i64: 16, 16>}, {pipeline_mode = #tpu.pipeline_mode<synchronous>, transform_indices = @transform_2, window_bounds = array<i64: 16, 32>}, {pipeline_mode = #tpu.pipeline_mode<synchronous>, transform_indices = @transform_3, window_bounds = array<i64: 16, 32>}, {pipeline_mode = #tpu.pipeline_mode<synchronous>, transform_indices = @transform_4, window_bounds = array<i64: 1, 32>}, {pipeline_mode = #tpu.pipeline_mode<synchronous>, transform_indices = @transform_5, window_bounds = array<i64: 1, 32>}, {pipeline_mode = #tpu.pipeline_mode<synchronous>, transform_indices = @transform_6, window_bounds = array<i64: 1, 32>}, {pipeline_mode = #tpu.pipeline_mode<synchronous>, transform_indices = @transform_7, window_bounds = array<i64: 32, 128>}, {pipeline_mode = #tpu.pipeline_mode<synchronous>, transform_indices = @transform_8, window_bounds = array<i64: 1, 128>}, {transform_indices = @transform_9, window_bounds = array<i64: 16, 128>}]} {
    %c0 = arith.constant 0 : index
    %c0_0 = arith.constant 0 : index
    %0 = vector.load %arg1[%c0, %c0_0] : memref<16x16xf32, #tpu.memory_space<vmem>>, vector<16x16xf32>
    %c0_1 = arith.constant 0 : index
    %c0_2 = arith.constant 0 : index
    %1 = vector.load %arg3[%c0_1, %c0_2] : memref<16x32xf32, #tpu.memory_space<vmem>>, vector<16x32xf32>
    %cst = arith.constant dense<0.000000e+00> : vector<16x32xf32>
    %2 = tpu.matmul %0, %1, %cst {dimension_numbers = #tpu.dot_dimension_numbers<[1], [0], [0], [1], [0, 0, 1, 1], [], []>} : vector<16x16xf32>, vector<16x32xf32>, vector<16x32xf32> -> vector<16x32xf32>
    %c0_3 = arith.constant 0 : index
    %c0_4 = arith.constant 0 : index
    %3 = vector.load %arg2[%c0_3, %c0_4] : memref<16x16xf32, #tpu.memory_space<vmem>>, vector<16x16xf32>
    %c0_5 = arith.constant 0 : index
    %c0_6 = arith.constant 0 : index
    %4 = vector.load %arg4[%c0_5, %c0_6] : memref<16x32xf32, #tpu.memory_space<vmem>>, vector<16x32xf32>
    %cst_7 = arith.constant dense<0.000000e+00> : vector<16x32xf32>
    %5 = tpu.matmul %3, %4, %cst_7 {dimension_numbers = #tpu.dot_dimension_numbers<[1], [0], [0], [1], [0, 0, 1, 1], [], []>} : vector<16x16xf32>, vector<16x32xf32>, vector<16x32xf32> -> vector<16x32xf32>
    %6 = arith.addf %2, %5 : vector<16x32xf32>
    %c0_8 = arith.constant 0 : index
    %c0_9 = arith.constant 0 : index
    %7 = vector.load %arg5[%c0_8, %c0_9] : memref<1x32xf32, #tpu.memory_space<vmem>>, vector<1x32xf32>
    %8 = vector.broadcast %7 : vector<1x32xf32> to vector<16x32xf32>
    %9 = arith.addf %6, %8 : vector<16x32xf32>
    %10 = math.tanh %9 : vector<16x32xf32>
    %cst_10 = arith.constant dense<0.000000e+00> : vector<16xf32>
    %11 = vector.multi_reduction <add>, %10, %cst_10 [1] : vector<16x32xf32> to vector<16xf32>
    %12 = vector.shape_cast %11 : vector<16xf32> to vector<16x1xf32>
    %cst_11 = arith.constant 3.200000e+01 : f32
    %13 = vector.broadcast %cst_11 : f32 to vector<16x1xf32>
    %14 = arith.divf %12, %13 : vector<16x1xf32>
    %15 = arith.mulf %10, %10 : vector<16x32xf32>
    %cst_12 = arith.constant dense<0.000000e+00> : vector<16xf32>
    %16 = vector.multi_reduction <add>, %15, %cst_12 [1] : vector<16x32xf32> to vector<16xf32>
    %17 = vector.shape_cast %16 : vector<16xf32> to vector<16x1xf32>
    %cst_13 = arith.constant 3.200000e+01 : f32
    %18 = vector.broadcast %cst_13 : f32 to vector<16x1xf32>
    %19 = arith.divf %17, %18 : vector<16x1xf32>
    %20 = arith.mulf %14, %14 : vector<16x1xf32>
    %21 = arith.subf %19, %20 : vector<16x1xf32>
    %22 = vector.broadcast %14 : vector<16x1xf32> to vector<16x32xf32>
    %23 = arith.subf %10, %22 : vector<16x32xf32>
    %cst_14 = arith.constant 9.99999974E-6 : f32
    %24 = vector.broadcast %cst_14 : f32 to vector<16x1xf32>
    %25 = arith.addf %21, %24 : vector<16x1xf32>
    %26 = math.rsqrt %25 : vector<16x1xf32>
    %27 = vector.broadcast %26 : vector<16x1xf32> to vector<16x32xf32>
    %28 = arith.mulf %23, %27 : vector<16x32xf32>
    %c0_15 = arith.constant 0 : index
    %c0_16 = arith.constant 0 : index
    %29 = vector.load %arg6[%c0_15, %c0_16] : memref<1x32xf32, #tpu.memory_space<vmem>>, vector<1x32xf32>
    %30 = vector.broadcast %29 : vector<1x32xf32> to vector<16x32xf32>
    %31 = arith.mulf %28, %30 : vector<16x32xf32>
    %c0_17 = arith.constant 0 : index
    %c0_18 = arith.constant 0 : index
    %32 = vector.load %arg7[%c0_17, %c0_18] : memref<1x32xf32, #tpu.memory_space<vmem>>, vector<1x32xf32>
    %33 = vector.broadcast %32 : vector<1x32xf32> to vector<16x32xf32>
    %34 = arith.addf %31, %33 : vector<16x32xf32>
    %c0_19 = arith.constant 0 : index
    %c0_20 = arith.constant 0 : index
    %35 = vector.load %arg8[%c0_19, %c0_20] : memref<32x128xf32, #tpu.memory_space<vmem>>, vector<32x128xf32>
    %cst_21 = arith.constant dense<0.000000e+00> : vector<16x128xf32>
    %36 = tpu.matmul %34, %35, %cst_21 {dimension_numbers = #tpu.dot_dimension_numbers<[1], [0], [0], [1], [0, 0, 1, 1], [], []>} : vector<16x32xf32>, vector<32x128xf32>, vector<16x128xf32> -> vector<16x128xf32>
    %c0_22 = arith.constant 0 : index
    %c0_23 = arith.constant 0 : index
    %37 = vector.load %arg9[%c0_22, %c0_23] : memref<1x128xf32, #tpu.memory_space<vmem>>, vector<1x128xf32>
    %38 = vector.broadcast %37 : vector<1x128xf32> to vector<16x128xf32>
    %39 = arith.addf %36, %38 : vector<16x128xf32>
    %c0_24 = arith.constant 0 : index
    %c0_25 = arith.constant 0 : index
    %40 = vector.load %arg10[%c0_24, %c0_25] : memref<16x128xf32, #tpu.memory_space<vmem>>, vector<16x128xf32>
    tpu.vector_store %arg10[%c0_24, %c0_25], %39 {strides = array<i32>} : memref<16x128xf32, #tpu.memory_space<vmem>>, vector<16x128xf32>,
    return
  }
  func.func @transform_0(%arg0: i32) -> (i32, i32) {
    %c0_i32 = arith.constant 0 : i32
    %c0_i32_0 = arith.constant 0 : i32
    return %arg0, %c0_i32 : i32, i32
  }
  func.func @transform_1(%arg0: i32) -> (i32, i32) {
    %c0_i32 = arith.constant 0 : i32
    %c0_i32_0 = arith.constant 0 : i32
    return %arg0, %c0_i32 : i32, i32
  }
  func.func @transform_2(%arg0: i32) -> (i32, i32) {
    %c0_i32 = arith.constant 0 : i32
    %c0_i32_0 = arith.constant 0 : i32
    %c0_i32_1 = arith.constant 0 : i32
    return %c0_i32, %c0_i32_0 : i32, i32
  }
  func.func @transform_3(%arg0: i32) -> (i32, i32) {
    %c0_i32 = arith.constant 0 : i32
    %c0_i32_0 = arith.constant 0 : i32
    %c0_i32_1 = arith.constant 0 : i32
    return %c0_i32, %c0_i32_0 : i32, i32
  }
  func.func @transform_4(%arg0: i32) -> (i32, i32) {
    %c0_i32 = arith.constant 0 : i32
    %c0_i32_0 = arith.constant 0 : i32
    %c0_i32_1 = arith.constant 0 : i32
    return %c0_i32, %c0_i32_0 : i32, i32
  }
  func.func @transform_5(%arg0: i32) -> (i32, i32) {
    %c0_i32 = arith.constant 0 : i32
    %c0_i32_0 = arith.constant 0 : i32
    %c0_i32_1 = arith.constant 0 : i32
    return %c0_i32, %c0_i32_0 : i32, i32
  }
  func.func @transform_6(%arg0: i32) -> (i32, i32) {
    %c0_i32 = arith.constant 0 : i32
    %c0_i32_0 = arith.constant 0 : i32
    %c0_i32_1 = arith.constant 0 : i32
    return %c0_i32, %c0_i32_0 : i32, i32
  }
  func.func @transform_7(%arg0: i32) -> (i32, i32) {
    %c0_i32 = arith.constant 0 : i32
    %c0_i32_0 = arith.constant 0 : i32
    %c0_i32_1 = arith.constant 0 : i32
    return %c0_i32, %c0_i32_0 : i32, i32
  }
  func.func @transform_8(%arg0: i32) -> (i32, i32) {
    %c0_i32 = arith.constant 0 : i32
    %c0_i32_0 = arith.constant 0 : i32
    %c0_i32_1 = arith.constant 0 : i32
    return %c0_i32, %c0_i32_0 : i32, i32
  }
  func.func @transform_9(%arg0: i32) -> (i32, i32) {
    %c0_i32 = arith.constant 0 : i32
    %c0_i32_0 = arith.constant 0 : i32
    return %arg0, %c0_i32 : i32, i32
  }
}

</mosaic_0001>

<llo_original>
// kernel: tpu_custom_call.1
$region0: #{tpu_custom_call.1}
  #allocation0 [shape = 'u32[]', space=smem, size = 0x4, offset = 0x4, fixed_abs, tag = 'smem constant byte address 0x4 - core index']
  #allocation1 [shape = 'u32[72,128]{1,0:T(1,128)}', space=vmem, size = 0x9000, scoped, tag = 'internal scratch']
  %s0 = inlined_call_operand.hbm [shape: f32[16,16], index: 0, kind: input, shape index: {}]
  %s1 = inlined_call_operand.hbm [shape: f32[16,16], index: 1, kind: input, shape index: {}]
  %s2 = inlined_call_operand.hbm [shape: f32[16,32], index: 2, kind: input, shape index: {}]
  %s3 = inlined_call_operand.hbm [shape: f32[16,32], index: 3, kind: input, shape index: {}]
  %s4 = inlined_call_operand.vmem [shape: f32[1,32], index: 4, kind: input, shape index: {}]
  %s5 = inlined_call_operand.vmem [shape: f32[1,32], index: 5, kind: input, shape index: {}]
  %s6 = inlined_call_operand.vmem [shape: f32[1,32], index: 6, kind: input, shape index: {}]
  %s7 = inlined_call_operand.hbm [shape: f32[32,128], index: 7, kind: input, shape index: {}]
  %s8 = inlined_call_operand.vmem [shape: f32[1,128], index: 8, kind: input, shape index: {}]
  %s9 = inlined_call_operand.hbm [shape: f32[16,128], index: 9, kind: output, shape index: {}]
  %s10 = sld [smem:[#allocation0]]
  $region66: #{tpu_custom_call.1} parent=0
    _
  %s12 = ssub.s32 1, %s10
  %s13 = scalar_select 0, %s12, %s10
  $region1: #{tpu_custom_call.1} parent=0
    #allocation2 [shape = 'u8[8192]{0}', space=vmem, size = 0x2000, scoped, tag = 'input window, operand 0, single buffered']
    #allocation3 [shape = 's32[1]{0}', space=sflag, size = 0x4, scoped, tag = 'scoped memory for tpu_custom_call.1']
    #allocation4 [shape = 's32[1]{0}', space=sflag, size = 0x4, scoped, tag = 'scoped memory for tpu_custom_call.1']
    #allocation5 [shape = 'u8[8192]{0}', space=vmem, size = 0x2000, scoped, tag = 'input window, operand 1, single buffered']
    #allocation6 [shape = 's32[1]{0}', space=sflag, size = 0x4, scoped, tag = 'scoped memory for tpu_custom_call.1']
    #allocation7 [shape = 'u8[8192]{0}', space=vmem, size = 0x2000, scoped, tag = 'input window, operand 2, single buffered']
    #allocation8 [shape = 'u8[8192]{0}', space=vmem, size = 0x2000, scoped, tag = 'input window, operand 3, single buffered']
    #allocation9 [shape = 's32[1]{0}', space=sflag, size = 0x4, scoped, tag = 'scoped memory for tpu_custom_call.1']
    #allocation10 [shape = 'u8[16384]{0}', space=vmem, size = 0x4000, scoped, tag = 'input window, operand 7, single buffered']
    #allocation11 [shape = 'u8[8192]{0}', space=vmem, size = 0x2000, scoped, tag = 'output window, operand 0, single buffered']
    %14 = vsyncpa [#allocation3], 0
    %15 = vsyncpa [#allocation6], 0
    %16 = vsyncpa [#allocation9], 0
    %17 = vsyncpa [#allocation4], 0
    // Predicated region
    $region2: #{tpu_custom_call.1} parent=1 // pred_check
      _
    $region3: #{tpu_custom_call.1} parent=1 // pred_check_branch
      %19 = sbr.rel (0) target = $region5
    $region4: #{tpu_custom_call.1} parent=1 // pred_region
      %21 = vsyncadd [#allocation3], 0
      %s22 = sshll.u32 %s0, 4
      %s23 = int_to_ptr.hbm [resolvable:$true] %s22
      %s24 = sshll.u32 [#allocation2], 4
      %s25 = int_to_ptr.vmem [resolvable:$true] %s24
      %30 = dma.hbm_to_vmem [thread:$0]  %s23, 256, %s25, [#allocation3], 128, 128, 8
    $region5: #{tpu_custom_call.1} parent=1 // pred_fallthru
      _
    // Predicated region
    $region6: #{tpu_custom_call.1} parent=1 // pred_check
      _
    $region7: #{tpu_custom_call.1} parent=1 // pred_check_branch
      %32 = sbr.rel (0) target = $region9
    $region8: #{tpu_custom_call.1} parent=1 // pred_region
      %34 = vsyncadd [#allocation6], 0
      %s35 = sshll.u32 %s1, 4
      %s36 = int_to_ptr.hbm [resolvable:$true] %s35
      %s37 = sshll.u32 [#allocation5], 4
      %s38 = int_to_ptr.vmem [resolvable:$true] %s37
      %43 = dma.hbm_to_vmem [thread:$0]  %s36, 256, %s38, [#allocation6], 128, 128, 8
    $region9: #{tpu_custom_call.1} parent=1 // pred_fallthru
      _
    // Predicated region
    $region10: #{tpu_custom_call.1} parent=1 // pred_check
      _
    $region11: #{tpu_custom_call.1} parent=1 // pred_check_branch
      %45 = sbr.rel (0) target = $region13
    $region12: #{tpu_custom_call.1} parent=1 // pred_region
      %47 = vsyncadd [#allocation6], 0
      %s48 = sshll.u32 %s2, 4
      %s49 = int_to_ptr.hbm [resolvable:$true] %s48
      %s50 = sshll.u32 [#allocation7], 4
      %s51 = int_to_ptr.vmem [resolvable:$true] %s50
      %56 = dma.hbm_to_vmem [thread:$0]  %s49, 256, %s51, [#allocation6], 128, 128, 8
    $region13: #{tpu_custom_call.1} parent=1 // pred_fallthru
      _
    // Predicated region
    $region14: #{tpu_custom_call.1} parent=1 // pred_check
      _
    $region15: #{tpu_custom_call.1} parent=1 // pred_check_branch
      %58 = sbr.rel (0) target = $region17
    $region16: #{tpu_custom_call.1} parent=1 // pred_region
      %60 = vsyncadd [#allocation9], 0
      %s61 = sshll.u32 %s3, 4
      %s62 = int_to_ptr.hbm [resolvable:$true] %s61
      %s63 = sshll.u32 [#allocation8], 4
      %s64 = int_to_ptr.vmem [resolvable:$true] %s63
      %69 = dma.hbm_to_vmem [thread:$0]  %s62, 256, %s64, [#allocation9], 128, 128, 8
    $region17: #{tpu_custom_call.1} parent=1 // pred_fallthru
      _
    // Predicated region
    $region18: #{tpu_custom_call.1} parent=1 // pred_check
      _
    $region19: #{tpu_custom_call.1} parent=1 // pred_check_branch
      %71 = sbr.rel (0) target = $region21
    $region20: #{tpu_custom_call.1} parent=1 // pred_region
      _
    $region21: #{tpu_custom_call.1} parent=1 // pred_fallthru
      _
    // Predicated region
    $region22: #{tpu_custom_call.1} parent=1 // pred_check
      _
    $region23: #{tpu_custom_call.1} parent=1 // pred_check_branch
      %73 = sbr.rel (0) target = $region25
    $region24: #{tpu_custom_call.1} parent=1 // pred_region
      _
    $region25: #{tpu_custom_call.1} parent=1 // pred_fallthru
      _
    // Predicated region
    $region26: #{tpu_custom_call.1} parent=1 // pred_check
      _
    $region27: #{tpu_custom_call.1} parent=1 // pred_check_branch
      %75 = sbr.rel (0) target = $region29
    $region28: #{tpu_custom_call.1} parent=1 // pred_region
      _
    $region29: #{tpu_custom_call.1} parent=1 // pred_fallthru
      _
    // Predicated region
    $region30: #{tpu_custom_call.1} parent=1 // pred_check
      _
    $region31: #{tpu_custom_call.1} parent=1 // pred_check_branch
      %77 = sbr.rel (0) target = $region33
    $region32: #{tpu_custom_call.1} parent=1 // pred_region
      %79 = vsyncadd [#allocation9], 0
      %s80 = sshll.u32 %s7, 4
      %s81 = int_to_ptr.hbm [resolvable:$true] %s80
      %s82 = sshll.u32 [#allocation10], 4
      %s83 = int_to_ptr.vmem [resolvable:$true] %s82
      %88 = dma.hbm_to_vmem [thread:$0]  %s81, 512, %s83, [#allocation9], 128, 128, 8
    $region33: #{tpu_custom_call.1} parent=1 // pred_fallthru
      _
    // Predicated region
    $region34: #{tpu_custom_call.1} parent=1 // pred_check
      _
    $region35: #{tpu_custom_call.1} parent=1 // pred_check_branch
      %90 = sbr.rel (0) target = $region37
    $region36: #{tpu_custom_call.1} parent=1 // pred_region
      _
    $region37: #{tpu_custom_call.1} parent=1 // pred_fallthru
      _
    // Predicated region
    $region38: #{tpu_custom_call.1} parent=1 // pred_check
      _
    $region39: #{tpu_custom_call.1} parent=1 // pred_check_branch
      %92 = sbr.rel (0) target = $region41
    $region40: #{tpu_custom_call.1} parent=1 // pred_region
      %94 = dma.done [#allocation3], 256
    $region41: #{tpu_custom_call.1} parent=1 // pred_fallthru
      _
    // Predicated region
    $region42: #{tpu_custom_call.1} parent=1 // pred_check
      _
    $region43: #{tpu_custom_call.1} parent=1 // pred_check_branch
      %96 = sbr.rel (0) target = $region45
    $region44: #{tpu_custom_call.1} parent=1 // pred_region
      %98 = dma.done [#allocation6], 256
    $region45: #{tpu_custom_call.1} parent=1 // pred_fallthru
      _
    // Predicated region
    $region46: #{tpu_custom_call.1} parent=1 // pred_check
      _
    $region47: #{tpu_custom_call.1} parent=1 // pred_check_branch
      %100 = sbr.rel (0) target = $region49
    $region48: #{tpu_custom_call.1} parent=1 // pred_region
      %102 = dma.done [#allocation6], 256
    $region49: #{tpu_custom_call.1} parent=1 // pred_fallthru
      _
    // Predicated region
    $region50: #{tpu_custom_call.1} parent=1 // pred_check
      _
    $region51: #{tpu_custom_call.1} parent=1 // pred_check_branch
      %104 = sbr.rel (0) target = $region53
    $region52: #{tpu_custom_call.1} parent=1 // pred_region
      %106 = dma.done [#allocation9], 256
    $region53: #{tpu_custom_call.1} parent=1 // pred_fallthru
      _
    // Predicated region
    $region54: #{tpu_custom_call.1} parent=1 // pred_check
      _
    $region55: #{tpu_custom_call.1} parent=1 // pred_check_branch
      %108 = sbr.rel (0) target = $region57
    $region56: #{tpu_custom_call.1} parent=1 // pred_region
      %110 = dma.done [#allocation9], 512
    $region57: #{tpu_custom_call.1} parent=1 // pred_fallthru
      _
    %v111 = vld [vmem:[#allocation2] sm:$0xff]
    %v112 = vld [vmem:[#allocation2 + $0x8] sm:$0xff]
    %v113 = vld [vmem:[#allocation7] sm:$0xff]
    %v114 = vld [vmem:[#allocation7 + $0x8] sm:$0xff]
    %v115 = vld [vmem:[#allocation5] sm:$0xff]
    %v116 = vld [vmem:[#allocation5 + $0x8] sm:$0xff]
    %v117 = vld [vmem:[#allocation8] sm:$0xff]
    %v118 = vld [vmem:[#allocation8 + $0x8] sm:$0xff]
    %vm119 = vcmask 130048
    %v121 = vsel %vm119, %v115, 0
    %v124 = vsel %vm119, %v116, 0
    %126 = vmatpush.msra.mxu0 0.0
    %127 = vmatpush.msra.mxu0 0.0
    %128 = vmatpush.msra.mxu0 0.0
    %129 = vmatpush.msra.mxu0 0.0
    %130 = vmatpush.msra.mxu0 0.0
    %131 = vmatpush.msra.mxu0 0.0
    %132 = vmatpush.msra.mxu0 0.0
    %133 = vmatpush.msra.mxu0 0.0
    %134 = vmatpush.msra.mxu0 0.0
    %135 = vmatpush.msra.mxu0 0.0
    %136 = vmatpush.msra.mxu0 0.0
    %137 = vmatpush.msra.mxu0 0.0
    %138 = vmatpush.msra.mxu0 0.0
    %139 = vmatpush.msra.mxu0 0.0
    %140 = vmatpush.msra.mxu0 %v118
    %141 = vmatpush.msra.mxu0 %v117
    %142 = vmatmul.f32.gmra.mxu0 %v121
    %v143 = vpop.f32.mrf.mxu0
    %v144 = vadd.f32 0.0, %v143
    %145 = vmatmul.f32.gmra.mxu0 %v124
    %v146 = vpop.f32.mrf.mxu0
    %v147 = vadd.f32 0.0, %v146
    %148 = vdwg.mxu0
    %v150 = vsel %vm119, %v111, 0
    %v153 = vsel %vm119, %v112, 0
    %155 = vmatpush.msra.mxu0 0.0
    %156 = vmatpush.msra.mxu0 0.0
    %157 = vmatpush.msra.mxu0 0.0
    %158 = vmatpush.msra.mxu0 0.0
    %159 = vmatpush.msra.mxu0 0.0
    %160 = vmatpush.msra.mxu0 0.0
    %161 = vmatpush.msra.mxu0 0.0
    %162 = vmatpush.msra.mxu0 0.0
    %163 = vmatpush.msra.mxu0 0.0
    %164 = vmatpush.msra.mxu0 0.0
    %165 = vmatpush.msra.mxu0 0.0
    %166 = vmatpush.msra.mxu0 0.0
    %167 = vmatpush.msra.mxu0 0.0
    %168 = vmatpush.msra.mxu0 0.0
    %169 = vmatpush.msra.mxu0 %v114
    %170 = vmatpush.msra.mxu0 %v113
    %171 = vmatmul.f32.gmra.mxu0 %v150
    %v172 = vpop.f32.mrf.mxu0
    %v173 = vadd.f32 %v144, %v172
    %174 = vmatmul.f32.gmra.mxu0 %v153
    %v175 = vpop.f32.mrf.mxu0
    %v176 = vadd.f32 %v147, %v175
    %177 = vdwg.mxu0
    %v178 = vld [vmem:[%s4] sm:$0x1]
    %v180 = vperm.slane %v178, 0
    %v182 = vadd.f32 %v173, %v180
    %v183 = vadd.f32 %v176, %v180
    %v184 = vtanh.pop %v182
    %v185 = vtanh.pop %v183
    %vm186 = vcmask 261120
    %v187 = vsel %vm186, %v184, 0.0
    %188 = vadd.xlane.f32.xlu0 %v187
    %v189 = vpop.xlane.xlu0 %188
    %v190 = vsel %vm186, %v185, 0.0
    %191 = vadd.xlane.f32.xlu0 %v190
    %v192 = vpop.xlane.xlu0 %191
    %v193 = vrcp.pop 32.0
    %v194 = vmul.f32 32.0, %v193
    %v195 = vsub.f32 1.0, %v194
    %v196 = vmul.f32 %v193, %v195
    %v197 = vadd.f32 %v193, %v196
    %vm198 = vweird.f32 %v193
    %v199 = vsel %vm198, %v193, %v197
    %v200 = vmul.f32 %v189, %v199
    %v201 = vmul.f32 %v192, %v199
    %v202 = vmul.f32 %v184, %v184
    %v203 = vmul.f32 %v185, %v185
    %v204 = vsel %vm186, %v202, 0.0
    %205 = vadd.xlane.f32.xlu0 %v204
    %v206 = vpop.xlane.xlu0 %205
    %v207 = vsel %vm186, %v203, 0.0
    %208 = vadd.xlane.f32.xlu0 %v207
    %v209 = vpop.xlane.xlu0 %208
    %v210 = vmul.f32 %v206, %v199
    %v211 = vmul.f32 %v209, %v199
    %v212 = vmul.f32 %v200, %v200
    %v213 = vmul.f32 %v201, %v201
    %v214 = vsub.f32 %v210, %v212
    %v215 = vsub.f32 %v211, %v213
    %v216 = vsub.f32 %v184, %v200
    %v217 = vsub.f32 %v185, %v201
    %v218 = vadd.f32 %v214, 1e-05
    %v219 = vadd.f32 %v215, 1e-05
    %v220 = vrsqrt.pop %v218
    %v221 = vmul.f32 %v220, %v218
    %v222 = vmul.f32 %v221, %v220
    %v223 = vmul.f32 0.5, %v222
    %v224 = vsub.f32 1.5, %v223
    %v225 = vmul.f32 %v220, %v224
    %vm226 = vweird.f32 %v218
    %vm227 = vweird.f32 %v220
    %vm228 = vmor %vm226, %vm227
    %v229 = vsel %vm228, %v220, %v225
    %v230 = vrsqrt.pop %v219
    %v231 = vmul.f32 %v230, %v219
    %v232 = vmul.f32 %v231, %v230
    %v233 = vmul.f32 0.5, %v232
    %v234 = vsub.f32 1.5, %v233
    %v235 = vmul.f32 %v230, %v234
    %vm236 = vweird.f32 %v219
    %vm237 = vweird.f32 %v230
    %vm238 = vmor %vm236, %vm237
    %v239 = vsel %vm238, %v230, %v235
    %v240 = vmul.f32 %v216, %v229
    %v241 = vmul.f32 %v217, %v239
    %v242 = vld [vmem:[%s5] sm:$0x1]
    %v244 = vperm.slane %v242, 0
    %v246 = vmul.f32 %v240, %v244
    %v247 = vmul.f32 %v241, %v244
    %v248 = vld [vmem:[%s6] sm:$0x1]
    %v250 = vperm.slane %v248, 0
    %v252 = vadd.f32 %v246, %v250
    %v253 = vadd.f32 %v247, %v250
    %v254 = vld [vmem:[#allocation10] sm:$0xff]
    %v255 = vld [vmem:[#allocation10 + $0x8] sm:$0xff]
    %v256 = vld [vmem:[#allocation10 + $0x10] sm:$0xff]
    %v257 = vld [vmem:[#allocation10 + $0x18] sm:$0xff]
    %v258 = vld [vmem:[%s8] sm:$0x1]
    %v260 = vperm.slane %v258, 0
    %v263 = vsel %vm186, %v252, 0
    %v266 = vsel %vm186, %v253, 0
    %268 = vmatpush.msra.mxu0 0.0
    %269 = vmatpush.msra.mxu0 0.0
    %270 = vmatpush.msra.mxu0 0.0
    %271 = vmatpush.msra.mxu0 0.0
    %272 = vmatpush.msra.mxu0 0.0
    %273 = vmatpush.msra.mxu0 0.0
    %274 = vmatpush.msra.mxu0 0.0
    %275 = vmatpush.msra.mxu0 0.0
    %276 = vmatpush.msra.mxu0 0.0
    %277 = vmatpush.msra.mxu0 0.0
    %278 = vmatpush.msra.mxu0 0.0
    %279 = vmatpush.msra.mxu0 0.0
    %280 = vmatpush.msra.mxu0 %v257
    %281 = vmatpush.msra.mxu0 %v256
    %282 = vmatpush.msra.mxu0 %v255
    %283 = vmatpush.msra.mxu0 %v254
    %284 = vmatmul.f32.gmra.mxu0 %v263
    %v285 = vpop.f32.mrf.mxu0
    %v286 = vadd.f32 %v260, %v285
    %287 = vmatmul.f32.gmra.mxu0 %v266
    %v288 = vpop.f32.mrf.mxu0
    %v289 = vadd.f32 %v260, %v288
    %290 = vdwg.mxu0
    %291 = vst [vmem:[#allocation11] sm:$0xff] %v286
    %292 = vst [vmem:[#allocation11 + $0x8] sm:$0xff] %v289
    // Predicated region
    $region58: #{tpu_custom_call.1} parent=1 // pred_check
      _
    $region59: #{tpu_custom_call.1} parent=1 // pred_check_branch
      %294 = sbr.rel (0) target = $region61
    $region60: #{tpu_custom_call.1} parent=1 // pred_region
      %296 = vsyncadd [#allocation4], 0
      %s297 = sshll.u32 [#allocation11], 4
      %s298 = int_to_ptr.vmem [resolvable:$true] %s297
      %s299 = sshll.u32 %s9, 4
      %s300 = int_to_ptr.hbm [resolvable:$true] %s299
      %305 = dma.vmem_to_hbm [thread:$0]  %s298, 256, %s300, [#allocation4], 128, 128, 8
    $region61: #{tpu_custom_call.1} parent=1 // pred_fallthru
      _
    // Predicated region
    $region62: #{tpu_custom_call.1} parent=1 // pred_check
      _
    $region63: #{tpu_custom_call.1} parent=1 // pred_check_branch
      %307 = sbr.rel (0) target = $region65
    $region64: #{tpu_custom_call.1} parent=1 // pred_region
      %309 = dma.done [#allocation4], 256
    $region65: #{tpu_custom_call.1} parent=1 // pred_fallthru
      _
    %310 = vsyncpa [#allocation3], 1
    %311 = vsyncpa [#allocation6], 1
    %312 = vsyncpa [#allocation9], 1
    %313 = vsyncpa [#allocation4], 1

</llo_original>
